<compile_context>
chip_gen: v7x
topology: tpu7x:2x2x1
jax: 0.10.0
libtpu: 0.0.40
codegen_flags: <defaults>
</compile_context>

<pallas_src>
import math
import functools

import jax
import jax.numpy as jnp
from jax import lax
from jax.experimental import pallas as pl
from jax.experimental.pallas import tpu as pltpu


def _padded_bytes(shape, itemsize=4):
    """VMEM footprint of an f32 block after (8,128) tiling of the last two dims."""
    s = list(shape)
    s[-1] = -(-s[-1] // 128) * 128
    if len(s) >= 2:
        s[-2] = -(-s[-2] // 8) * 8
    n = 1
    for d in s:
        n *= int(d)
    return n * itemsize


def _pick_block_b(B, D, budget=8 << 20):
    """Largest divisor of B whose double-buffered (tb,D,D) tile fits `budget`."""
    per_row = _padded_bytes((1, D, D))
    tb = max(1, min(B, budget // (2 * per_row)))
    while B % tb:
        tb -= 1
    return tb


def _vmem_estimate(N, B, C, D, tb):
    est = (2 * _padded_bytes((N, D)) + 4 * _padded_bytes((B, C))
           + 2 * _padded_bytes((1, C)) + 2 * _padded_bytes((tb, D, D))
           + _padded_bytes((B, 1)) + 6 * _padded_bytes((N, N)) + (4 << 20))
    return int(min(max(est, 16 << 20), 48 << 20))


def _lsc_kernel(z_ref, ci_ref, cj_ref, prior_ref, zsig_ref,
                out_ref, ss_ref, *, batch_size, block_b, temperature, ratio):
    B = batch_size
    N = 2 * B
    tb = block_b
    inv_t = 1.0 / temperature

    bidx = pl.program_id(0)
    nb = pl.num_programs(0)

    # ---- streamed quadratic sigma term: 0.5*ratio/t^2 * z_i^T Sigma z_i ------
    # Scale is folded out of the (tb,D,D) tensor and applied once at the end.
    start = pl.multiple_of(bidx * tb, tb)
    zi_tile = z_ref[pl.ds(start, tb), :].astype(jnp.float32)              # (tb, D)
    zsig = zsig_ref[...].astype(jnp.float32)                              # (tb, D, D)
    Sz = jnp.sum(zsig * zi_tile[:, None, :], axis=-1)                     # (tb, D)
    q = jnp.sum(zi_tile * Sz, axis=-1, keepdims=True)                     # (tb, 1)
    ss_ref[pl.ds(start, tb), :] = q * (0.5 * ratio * inv_t * inv_t)

    # ---- epilogue: NxN similarity + loss, only on the last grid step ----------
    @pl.when(bidx == nb - 1)
    def _():
        z = z_ref[...].astype(jnp.float32)                                # (N, D)
        # NT matmul on the MXU: contract the feature axis of both operands.
        sim = lax.dot_general(z, z, (((1,), (1,)), ((), ())),
                              preferred_element_type=jnp.float32) * inv_t  # (N, N)

        # Positives: sim[i, i+B] == sim[i+B, i] == <z_i, z_means> / t.
        zi_all = z[:B]
        zm_all = z[B:]
        sim_pos = jnp.sum(zi_all * zm_all, axis=-1, keepdims=True) * inv_t  # (B,1)
        # l_pos = exp(sim_pos + sim_sigma): one exp, no separate pos needed.
        l_pos = jnp.exp(sim_pos + ss_ref[...])                              # (B,1)

        # Negatives: exclude diagonal + partner BEFORE exp (diagonal exp would
        # overflow f32; the reference never exponentiates masked-out entries).
        row_ids = lax.broadcasted_iota(jnp.int32, (N, N), 0)
        col_ids = lax.broadcasted_iota(jnp.int32, (N, N), 1)
        partner = jnp.where(row_ids < B, row_ids + B, row_ids - B)
        keep = jnp.logical_and(col_ids != row_ids, col_ids != partner)
        esim = jnp.exp(jnp.where(keep, sim, -1e30))
        neg_sum = jnp.sum(esim, axis=1, keepdims=True)                      # (N,1)

        prior = prior_ref[...].astype(jnp.float32)                          # (1,C)
        Cdim = prior.shape[1]

        def _prior_of(c):
            c = c.astype(jnp.float32)                                       # (B,C)
            mx = jnp.max(c, axis=1, keepdims=True)
            col = lax.broadcasted_iota(jnp.int32, c.shape, 1)
            lab = jnp.min(jnp.where(c >= mx, col, Cdim), axis=1, keepdims=True)
            onehot = (col == lab).astype(jnp.float32)
            return jnp.sum(onehot * prior, axis=1, keepdims=True)           # (B,1)

        floor = (N - 2) * math.exp(-inv_t)

        def _half_loss(prior_z, ns):
            Ng = (-prior_z * (N - 2) * l_pos + ns) / (1.0 - prior_z)
            Ng = jnp.maximum(Ng, floor)
            # -log(pos / (l_pos + Ng)) == log(l_pos + Ng) - sim_pos
            return jnp.sum(jnp.log(l_pos + Ng) - sim_pos, axis=0, keepdims=True)

        total = (_half_loss(_prior_of(ci_ref[...]), neg_sum[:B])
                 + _half_loss(_prior_of(cj_ref[...]), neg_sum[B:]))          # (1,1)
        out_ref[...] = total / N


def local_structure_clustering_loss(z_i, z_means, z_sigma, c_i, c_j, prior_p,
                                    ratio, *, batch_size, temperature,
                                    block_b=None):
    """Forward pass of Local_structure_clustering as one Pallas call."""
    B = int(batch_size)
    N = 2 * B
    D = z_i.shape[-1]
    C = c_i.shape[-1]

    # Single wrapper-side concat (needed for the contiguous NxN Gram matrix);
    # no dtype casts here -- the kernel upcasts to f32 on the fly.
    z = jnp.concatenate([z_i, z_means], axis=0)                             # (N, D)
    prior2d = jnp.asarray(prior_p).reshape(1, C)

    if block_b is None:
        block_b = _pick_block_b(B, D)
    assert B % block_b == 0, "block_b must divide batch_size"
    nb = B // block_b

    kernel = functools.partial(
        _lsc_kernel, batch_size=B, block_b=int(block_b),
        temperature=float(temperature), ratio=float(ratio))

    grid_spec = pltpu.PrefetchScalarGridSpec(
        num_scalar_prefetch=0,
        grid=(nb,),
        in_specs=[
            pl.BlockSpec((N, D), lambda b: (0, 0)),              # z: resident
            pl.BlockSpec((B, C), lambda b: (0, 0)),              # c_i: resident
            pl.BlockSpec((B, C), lambda b: (0, 0)),              # c_j: resident
            pl.BlockSpec((1, C), lambda b: (0, 0)),              # prior: resident
            pl.BlockSpec((block_b, D, D), lambda b: (b, 0, 0)),  # z_sigma: streamed
        ],
        out_specs=pl.BlockSpec((1, 1), lambda b: (0, 0)),
        scratch_shapes=[pltpu.VMEM((B, 1), jnp.float32)],
    )

    out = pl.pallas_call(
        kernel,
        out_shape=jax.ShapeDtypeStruct((1, 1), jnp.float32),
        grid_spec=grid_spec,
        compiler_params=pltpu.CompilerParams(
            dimension_semantics=("arbitrary",),
            vmem_limit_bytes=_vmem_estimate(N, B, C, D, block_b)),
    )(z, c_i, c_j, prior2d, z_sigma)
    return out[0, 0]


def _reference(z_i, z_means, z_sigma, c_i, c_j, prior_p, ratio,
               batch_size, temperature):
    """Pure-JAX mirror of the PyTorch forward, for correctness checking."""
    N = 2 * batch_size
    z = jnp.concatenate([z_i, z_means], axis=0)
    sim = z @ z.T / temperature
    sim_pos = jnp.concatenate([jnp.diagonal(sim, batch_size),
                               jnp.diagonal(sim, -batch_size)])
    pos = jnp.exp(sim_pos)
    mask = jnp.ones((N, N), bool)
    mask = mask.at[jnp.arange(N), jnp.arange(N)].set(False)
    idx = jnp.arange(batch_size)
    mask = mask.at[idx, batch_size + idx].set(False)
    mask = mask.at[batch_size + idx, idx].set(False)
    neg_sum = jnp.sum(jnp.where(mask, jnp.exp(sim), 0.0), axis=-1)
    zs = z_sigma * ratio / temperature
    Sz = jnp.einsum('bde,be->bd', zs, z_i)
    sim_sigma = jnp.sum(z_i * 0.5 * Sz, axis=-1)
    sim_sigma = jnp.concatenate([sim_sigma, sim_sigma]) / temperature
    l_pos = jnp.exp(sim_pos + sim_sigma)
    label = jnp.argmax(jnp.concatenate([c_i, c_j], axis=0), axis=1)
    prior_z = jnp.asarray(prior_p)[label]
    Ng = (-prior_z * (N - 2) * l_pos + neg_sum) / (1 - prior_z)
    Ng = jnp.maximum(Ng, (N - 2) * math.e ** (-1 / temperature))
    return jnp.mean(-jnp.log(pos / (l_pos + Ng)))


if __name__ == "__main__":
    B, D, C = 8, 32, 6
    temperature = 0.5
    ratio = 0.1

    key = jax.random.PRNGKey(0)
    k1, k2, k3, k4, k5, k6 = jax.random.split(key, 6)
    z_i = jax.random.normal(k1, (B, D), jnp.float32)
    z_means = jax.random.normal(k2, (B, D), jnp.float32)
    z_sigma = 0.1 * jax.random.normal(k3, (B, D, D), jnp.float32)
    c_i = jax.nn.softmax(jax.random.normal(k4, (B, C), jnp.float32), axis=-1)
    c_j = jax.nn.softmax(jax.random.normal(k5, (B, C), jnp.float32), axis=-1)
    prior_raw = jax.random.uniform(k6, (C,), jnp.float32, 0.05, 1.0)
    prior_p = prior_raw / jnp.sum(prior_raw)   # class priors in (0, 1)

    # block_b=4 -> 2-step grid, exercising the streamed z_sigma path.
    loss = local_structure_clustering_loss(
        z_i, z_means, z_sigma, c_i, c_j, prior_p, ratio,
        batch_size=B, temperature=temperature, block_b=4)
    loss = jax.block_until_ready(loss)

    ref = _reference(z_i, z_means, z_sigma, c_i, c_j, prior_p, ratio,
                     B, temperature)
    assert jnp.isfinite(loss), "kernel produced non-finite loss"
    assert jnp.allclose(loss, ref, rtol=2e-3, atol=2e-3), (loss, ref)
    print("KERNEL_OK")
</pallas_src>

<mosaic_0001>
module attributes {stable_mosaic.version = 11 : i64} {
  func.func @_lsc_kernel(%arg0: i32, %arg1: memref<16x32xf32, #tpu.memory_space<vmem>>, %arg2: memref<8x6xf32, #tpu.memory_space<vmem>>, %arg3: memref<8x6xf32, #tpu.memory_space<vmem>>, %arg4: memref<1x6xf32, #tpu.memory_space<vmem>>, %arg5: memref<4x32x32xf32, #tpu.memory_space<vmem>>, %arg6: memref<1x1xf32, #tpu.memory_space<vmem>>, %arg7: memref<8x1xf32, #tpu.memory_space<vmem>>) attributes {dimension_semantics = [#tpu.dimension_semantics<arbitrary>], iteration_bounds = array<i64: 2>, scalar_prefetch = 0 : i64, scratch_operands = 1 : i64, tpu.core_type = #tpu.core_type<tc>, window_params = [{pipeline_mode = #tpu.pipeline_mode<synchronous>, transform_indices = @transform_0, window_bounds = array<i64: 16, 32>}, {pipeline_mode = #tpu.pipeline_mode<synchronous>, transform_indices = @transform_1, window_bounds = array<i64: 8, 6>}, {pipeline_mode = #tpu.pipeline_mode<synchronous>, transform_indices = @transform_2, window_bounds = array<i64: 8, 6>}, {pipeline_mode = #tpu.pipeline_mode<synchronous>, transform_indices = @transform_3, window_bounds = array<i64: 1, 6>}, {transform_indices = @transform_4, window_bounds = array<i64: 4, 32, 32>}, {pipeline_mode = #tpu.pipeline_mode<synchronous>, transform_indices = @transform_5, window_bounds = array<i64: 1, 1>}]} {
    %c4_i32 = arith.constant 4 : i32
    %0 = arith.muli %arg0, %c4_i32 : i32
    %1 = tpu.assume_multiple %0, 4 : i32
    %2 = arith.index_cast %1 : i32 to index
    %c0 = arith.constant 0 : index
    %3 = vector.load %arg1[%2, %c0] : memref<16x32xf32, #tpu.memory_space<vmem>>, vector<4x32xf32>
    %c0_0 = arith.constant 0 : index
    %c0_1 = arith.constant 0 : index
    %c0_2 = arith.constant 0 : index
    %4 = vector.load %arg5[%c0_0, %c0_1, %c0_2] : memref<4x32x32xf32, #tpu.memory_space<vmem>>, vector<4x32x32xf32>
    %5 = vector.shape_cast %3 : vector<4x32xf32> to vector<4x1x32xf32>
    %6 = vector.broadcast %5 : vector<4x1x32xf32> to vector<4x32x32xf32>
    %7 = arith.mulf %4, %6 : vector<4x32x32xf32>
    %cst = arith.constant dense<0.000000e+00> : vector<4x32xf32>
    %8 = vector.multi_reduction <add>, %7, %cst [2] : vector<4x32x32xf32> to vector<4x32xf32>
    %9 = arith.mulf %3, %8 : vector<4x32xf32>
    %cst_3 = arith.constant dense<0.000000e+00> : vector<4xf32>
    %10 = vector.multi_reduction <add>, %9, %cst_3 [1] : vector<4x32xf32> to vector<4xf32>
    %11 = vector.shape_cast %10 : vector<4xf32> to vector<4x1xf32>
    %cst_4 = arith.constant 2.000000e-01 : f32
    %12 = vector.broadcast %cst_4 : f32 to vector<4x1xf32>
    %13 = arith.mulf %11, %12 : vector<4x1xf32>
    %14 = arith.index_cast %1 : i32 to index
    %c0_5 = arith.constant 0 : index
    %15 = vector.load %arg7[%14, %c0_5] : memref<8x1xf32, #tpu.memory_space<vmem>>, vector<4x1xf32>
    tpu.vector_store %arg7[%14, %c0_5], %13 {strides = array<i32>} : memref<8x1xf32, #tpu.memory_space<vmem>>, vector<4x1xf32>,
    %c1_i32 = arith.constant 1 : i32
    %16 = arith.cmpi eq, %arg0, %c1_i32 : i32
    %17 = arith.extui %16 : i1 to i32
    %c0_i32 = arith.constant 0 : i32
    %18 = arith.cmpi ne, %17, %c0_i32 : i32
    scf.if %18 {
      %c0_6 = arith.constant 0 : index
      %c0_7 = arith.constant 0 : index
      %19 = vector.load %arg1[%c0_6, %c0_7] : memref<16x32xf32, #tpu.memory_space<vmem>>, vector<16x32xf32>
      %cst_8 = arith.constant dense<0.000000e+00> : vector<16x16xf32>
      %20 = tpu.matmul %19, %19, %cst_8 {dimension_numbers = #tpu.dot_dimension_numbers<[1], [1], [0], [0], [0, 0, 1, 0], [], []>} : vector<16x32xf32>, vector<16x32xf32>, vector<16x16xf32> -> vector<16x16xf32>
      %cst_9 = arith.constant 2.000000e+00 : f32
      %21 = vector.broadcast %cst_9 : f32 to vector<16x16xf32>
      %22 = arith.mulf %20, %21 : vector<16x16xf32>
      %23 = vector.extract_strided_slice %19 {offsets = [0, 0], sizes = [8, 32], strides = [1, 1]} : vector<16x32xf32> to vector<8x32xf32>
      %24 = vector.extract_strided_slice %19 {offsets = [8, 0], sizes = [8, 32], strides = [1, 1]} : vector<16x32xf32> to vector<8x32xf32>
      %25 = arith.mulf %23, %24 : vector<8x32xf32>
      %cst_10 = arith.constant dense<0.000000e+00> : vector<8xf32>
      %26 = vector.multi_reduction <add>, %25, %cst_10 [1] : vector<8x32xf32> to vector<8xf32>
      %27 = vector.shape_cast %26 : vector<8xf32> to vector<8x1xf32>
      %cst_11 = arith.constant 2.000000e+00 : f32
      %28 = vector.broadcast %cst_11 : f32 to vector<8x1xf32>
      %29 = arith.mulf %27, %28 : vector<8x1xf32>
      %c0_12 = arith.constant 0 : index
      %c0_13 = arith.constant 0 : index
      %30 = vector.load %arg7[%c0_12, %c0_13] : memref<8x1xf32, #tpu.memory_space<vmem>>, vector<8x1xf32>
      %31 = arith.addf %29, %30 : vector<8x1xf32>
      %32 = math.exp %31 : vector<8x1xf32>
      %33 = tpu.iota {dimensions = array<i32: 0>} : vector<16x16xi32>
      %34 = tpu.iota {dimensions = array<i32: 1>} : vector<16x16xi32>
      %c8_i32 = arith.constant 8 : i32
      %35 = vector.broadcast %c8_i32 : i32 to vector<16x16xi32>
      %36 = arith.cmpi slt, %33, %35 : vector<16x16xi32>
      %c8_i32_14 = arith.constant 8 : i32
      %37 = vector.broadcast %c8_i32_14 : i32 to vector<16x16xi32>
      %38 = arith.addi %33, %37 : vector<16x16xi32>
      %c8_i32_15 = arith.constant 8 : i32
      %39 = vector.broadcast %c8_i32_15 : i32 to vector<16x16xi32>
      %40 = arith.subi %33, %39 : vector<16x16xi32>
      %41 = arith.select %36, %38, %40 : vector<16x16xi1>, vector<16x16xi32>
      %42 = arith.cmpi ne, %34, %33 : vector<16x16xi32>
      %43 = arith.cmpi ne, %34, %41 : vector<16x16xi32>
      %44 = arith.andi %42, %43 : vector<16x16xi1>
      %cst_16 = arith.constant -1.000000e+30 : f32
      %45 = vector.broadcast %cst_16 : f32 to vector<16x16xf32>
      %46 = arith.select %44, %22, %45 : vector<16x16xi1>, vector<16x16xf32>
      %47 = math.exp %46 : vector<16x16xf32>
      %cst_17 = arith.constant dense<0.000000e+00> : vector<16xf32>
      %48 = vector.multi_reduction <add>, %47, %cst_17 [1] : vector<16x16xf32> to vector<16xf32>
      %49 = vector.shape_cast %48 : vector<16xf32> to vector<16x1xf32>
      %c0_18 = arith.constant 0 : index
      %c0_19 = arith.constant 0 : index
      %50 = vector.load %arg4[%c0_18, %c0_19] : memref<1x6xf32, #tpu.memory_space<vmem>>, vector<1x6xf32>
      %c0_20 = arith.constant 0 : index
      %c0_21 = arith.constant 0 : index
      %51 = vector.load %arg2[%c0_20, %c0_21] : memref<8x6xf32, #tpu.memory_space<vmem>>, vector<8x6xf32>
      %cst_22 = arith.constant dense<0xFF800000> : vector<8xf32>
      %52 = vector.multi_reduction <maximumf>, %51, %cst_22 [1] : vector<8x6xf32> to vector<8xf32>
      %53 = vector.shape_cast %52 : vector<8xf32> to vector<8x1xf32>
      %54 = tpu.iota {dimensions = array<i32: 1>} : vector<8x6xi32>
      %55 = vector.broadcast %53 : vector<8x1xf32> to vector<8x6xf32>
      %56 = arith.cmpf oge, %51, %55 : vector<8x6xf32>
      %c6_i32 = arith.constant 6 : i32
      %57 = vector.broadcast %c6_i32 : i32 to vector<8x6xi32>
      %58 = arith.select %56, %54, %57 : vector<8x6xi1>, vector<8x6xi32>
      %cst_23 = arith.constant dense<2147483647> : vector<8xi32>
      %59 = vector.multi_reduction <minsi>, %58, %cst_23 [1] : vector<8x6xi32> to vector<8xi32>
      %60 = vector.shape_cast %59 : vector<8xi32> to vector<8x1xi32>
      %61 = vector.broadcast %60 : vector<8x1xi32> to vector<8x6xi32>
      %62 = arith.cmpi eq, %54, %61 : vector<8x6xi32>
      %63 = arith.extui %62 : vector<8x6xi1> to vector<8x6xi32>
      %64 = arith.sitofp %63 : vector<8x6xi32> to vector<8x6xf32>
      %65 = vector.broadcast %50 : vector<1x6xf32> to vector<8x6xf32>
      %66 = arith.mulf %64, %65 : vector<8x6xf32>
      %cst_24 = arith.constant dense<0.000000e+00> : vector<8xf32>
      %67 = vector.multi_reduction <add>, %66, %cst_24 [1] : vector<8x6xf32> to vector<8xf32>
      %68 = vector.shape_cast %67 : vector<8xf32> to vector<8x1xf32>
      %69 = vector.extract_strided_slice %49 {offsets = [0, 0], sizes = [8, 1], strides = [1, 1]} : vector<16x1xf32> to vector<8x1xf32>
      %cst_25 = arith.constant 0.000000e+00 : f32
      %70 = vector.broadcast %cst_25 : f32 to vector<8x1xf32>
      %71 = arith.subf %70, %68 : vector<8x1xf32>
      %cst_26 = arith.constant 1.400000e+01 : f32
      %72 = vector.broadcast %cst_26 : f32 to vector<8x1xf32>
      %73 = arith.mulf %71, %72 : vector<8x1xf32>
      %74 = arith.mulf %73, %32 : vector<8x1xf32>
      %75 = arith.addf %74, %69 : vector<8x1xf32>
      %cst_27 = arith.constant 1.000000e+00 : f32
      %76 = vector.broadcast %cst_27 : f32 to vector<8x1xf32>
      %77 = arith.subf %76, %68 : vector<8x1xf32>
      %78 = arith.divf %75, %77 : vector<8x1xf32>
      %cst_28 = arith.constant 1.89469397 : f32
      %79 = vector.broadcast %cst_28 : f32 to vector<8x1xf32>
      %80 = arith.maximumf %78, %79 : vector<8x1xf32>
      %81 = arith.addf %32, %80 : vector<8x1xf32>
      %82 = math.log %81 : vector<8x1xf32>
      %83 = arith.subf %82, %29 : vector<8x1xf32>
      %cst_29 = arith.constant dense<0.000000e+00> : vector<1xf32>
      %84 = vector.multi_reduction <add>, %83, %cst_29 [0] : vector<8x1xf32> to vector<1xf32>
      %85 = vector.shape_cast %84 : vector<1xf32> to vector<1x1xf32>
      %c0_30 = arith.constant 0 : index
      %c0_31 = arith.constant 0 : index
      %86 = vector.load %arg3[%c0_30, %c0_31] : memref<8x6xf32, #tpu.memory_space<vmem>>, vector<8x6xf32>
      %cst_32 = arith.constant dense<0xFF800000> : vector<8xf32>
      %87 = vector.multi_reduction <maximumf>, %86, %cst_32 [1] : vector<8x6xf32> to vector<8xf32>
      %88 = vector.shape_cast %87 : vector<8xf32> to vector<8x1xf32>
      %89 = tpu.iota {dimensions = array<i32: 1>} : vector<8x6xi32>
      %90 = vector.broadcast %88 : vector<8x1xf32> to vector<8x6xf32>
      %91 = arith.cmpf oge, %86, %90 : vector<8x6xf32>
      %c6_i32_33 = arith.constant 6 : i32
      %92 = vector.broadcast %c6_i32_33 : i32 to vector<8x6xi32>
      %93 = arith.select %91, %89, %92 : vector<8x6xi1>, vector<8x6xi32>
      %cst_34 = arith.constant dense<2147483647> : vector<8xi32>
      %94 = vector.multi_reduction <minsi>, %93, %cst_34 [1] : vector<8x6xi32> to vector<8xi32>
      %95 = vector.shape_cast %94 : vector<8xi32> to vector<8x1xi32>
      %96 = vector.broadcast %95 : vector<8x1xi32> to vector<8x6xi32>
      %97 = arith.cmpi eq, %89, %96 : vector<8x6xi32>
      %98 = arith.extui %97 : vector<8x6xi1> to vector<8x6xi32>
      %99 = arith.sitofp %98 : vector<8x6xi32> to vector<8x6xf32>
      %100 = vector.broadcast %50 : vector<1x6xf32> to vector<8x6xf32>
      %101 = arith.mulf %99, %100 : vector<8x6xf32>
      %cst_35 = arith.constant dense<0.000000e+00> : vector<8xf32>
      %102 = vector.multi_reduction <add>, %101, %cst_35 [1] : vector<8x6xf32> to vector<8xf32>
      %103 = vector.shape_cast %102 : vector<8xf32> to vector<8x1xf32>
      %104 = vector.extract_strided_slice %49 {offsets = [8, 0], sizes = [8, 1], strides = [1, 1]} : vector<16x1xf32> to vector<8x1xf32>
      %cst_36 = arith.constant 0.000000e+00 : f32
      %105 = vector.broadcast %cst_36 : f32 to vector<8x1xf32>
      %106 = arith.subf %105, %103 : vector<8x1xf32>
      %cst_37 = arith.constant 1.400000e+01 : f32
      %107 = vector.broadcast %cst_37 : f32 to vector<8x1xf32>
      %108 = arith.mulf %106, %107 : vector<8x1xf32>
      %109 = arith.mulf %108, %32 : vector<8x1xf32>
      %110 = arith.addf %109, %104 : vector<8x1xf32>
      %cst_38 = arith.constant 1.000000e+00 : f32
      %111 = vector.broadcast %cst_38 : f32 to vector<8x1xf32>
      %112 = arith.subf %111, %103 : vector<8x1xf32>
      %113 = arith.divf %110, %112 : vector<8x1xf32>
      %cst_39 = arith.constant 1.89469397 : f32
      %114 = vector.broadcast %cst_39 : f32 to vector<8x1xf32>
      %115 = arith.maximumf %113, %114 : vector<8x1xf32>
      %116 = arith.addf %32, %115 : vector<8x1xf32>
      %117 = math.log %116 : vector<8x1xf32>
      %118 = arith.subf %117, %29 : vector<8x1xf32>
      %cst_40 = arith.constant dense<0.000000e+00> : vector<1xf32>
      %119 = vector.multi_reduction <add>, %118, %cst_40 [0] : vector<8x1xf32> to vector<1xf32>
      %120 = vector.shape_cast %119 : vector<1xf32> to vector<1x1xf32>
      %121 = arith.addf %85, %120 : vector<1x1xf32>
      %cst_41 = arith.constant 1.600000e+01 : f32
      %122 = vector.broadcast %cst_41 : f32 to vector<1x1xf32>
      %123 = arith.divf %121, %122 : vector<1x1xf32>
      %c0_42 = arith.constant 0 : index
      %c0_43 = arith.constant 0 : index
      %124 = vector.load %arg6[%c0_42, %c0_43] : memref<1x1xf32, #tpu.memory_space<vmem>>, vector<1x1xf32>
      tpu.vector_store %arg6[%c0_42, %c0_43], %123 {strides = array<i32>} : memref<1x1xf32, #tpu.memory_space<vmem>>, vector<1x1xf32>,
    } else {
    }
    return
  }
  func.func @transform_0(%arg0: i32) -> (i32, i32) {
    %c0_i32 = arith.constant 0 : i32
    %c0_i32_0 = arith.constant 0 : i32
    %c0_i32_1 = arith.constant 0 : i32
    return %c0_i32, %c0_i32_0 : i32, i32
  }
  func.func @transform_1(%arg0: i32) -> (i32, i32) {
    %c0_i32 = arith.constant 0 : i32
    %c0_i32_0 = arith.constant 0 : i32
    %c0_i32_1 = arith.constant 0 : i32
    return %c0_i32, %c0_i32_0 : i32, i32
  }
  func.func @transform_2(%arg0: i32) -> (i32, i32) {
    %c0_i32 = arith.constant 0 : i32
    %c0_i32_0 = arith.constant 0 : i32
    %c0_i32_1 = arith.constant 0 : i32
    return %c0_i32, %c0_i32_0 : i32, i32
  }
  func.func @transform_3(%arg0: i32) -> (i32, i32) {
    %c0_i32 = arith.constant 0 : i32
    %c0_i32_0 = arith.constant 0 : i32
    %c0_i32_1 = arith.constant 0 : i32
    return %c0_i32, %c0_i32_0 : i32, i32
  }
  func.func @transform_4(%arg0: i32) -> (i32, i32, i32) {
    %c0_i32 = arith.constant 0 : i32
    %c0_i32_0 = arith.constant 0 : i32
    %c0_i32_1 = arith.constant 0 : i32
    return %arg0, %c0_i32, %c0_i32_0 : i32, i32, i32
  }
  func.func @transform_5(%arg0: i32) -> (i32, i32) {
    %c0_i32 = arith.constant 0 : i32
    %c0_i32_0 = arith.constant 0 : i32
    %c0_i32_1 = arith.constant 0 : i32
    return %c0_i32, %c0_i32_0 : i32, i32
  }
}

</mosaic_0001>

<llo_original>
// kernel: tpu_custom_call.1
$region0: #{tpu_custom_call.1}
  #allocation0 [shape = 'u32[]', space=smem, size = 0x4, offset = 0x4, fixed_abs, tag = 'smem constant byte address 0x4 - core index']
  #allocation1 [shape = 'u32[144,128]{1,0:T(1,128)}', space=vmem, size = 0x12000, scoped, tag = 'internal scratch']
  #allocation2 [shape = 'f32[8,1]{1,0:T(8,128)}', space=vmem, size = 0x1000, scoped, tag = 'scratch operand']
  %s0 = inlined_call_operand.hbm [shape: f32[16,32], index: 0, kind: input, shape index: {}]
  %s1 = inlined_call_operand.hbm [shape: f32[8,6], index: 1, kind: input, shape index: {}]
  %s2 = inlined_call_operand.hbm [shape: f32[8,6], index: 2, kind: input, shape index: {}]
  %s3 = inlined_call_operand.vmem [shape: f32[1,6], index: 3, kind: input, shape index: {}]
  %s4 = inlined_call_operand.hbm [shape: f32[8,32,32], index: 4, kind: input, shape index: {}]
  %s5 = inlined_call_operand.hbm [shape: f32[1,1], index: 5, kind: output, shape index: {}]
  %s6 = sld [smem:[#allocation0]]
  $region73: #{tpu_custom_call.1} parent=0
    _
  %s8 = ssub.s32 1, %s6
  %s9 = scalar_select 0, %s8, %s6
  $region1: #{tpu_custom_call.1} parent=0
    #allocation3 [shape = 'u8[8192]{0}', space=vmem, size = 0x2000, scoped, tag = 'input window, operand 0, single buffered']
    #allocation4 [shape = 's32[2]{0}', space=sflag, size = 0x8, scoped, tag = 'scoped memory for tpu_custom_call.1']
    #allocation5 [shape = 's32[2]{0}', space=sflag, size = 0x8, scoped, tag = 'scoped memory for tpu_custom_call.1']
    #allocation6 [shape = 'u8[4096]{0}', space=vmem, size = 0x1000, scoped, tag = 'input window, operand 1, single buffered']
    #allocation7 [shape = 's32[1]{0}', space=sflag, size = 0x4, scoped, tag = 'scoped memory for tpu_custom_call.1']
    #allocation8 [shape = 'u8[4096]{0}', space=vmem, size = 0x1000, scoped, tag = 'input window, operand 2, single buffered']
    #allocation9 [shape = 'u8[131072]{0}', space=vmem, size = 0x20000, scoped, tag = 'input window, operand 4']
    #allocation10 [shape = 's32[2]{0}', space=sflag, size = 0x8, scoped, tag = 'scoped memory for tpu_custom_call.1']
    #allocation11 [shape = 'u8[512]{0}', space=vmem, size = 0x400, scoped, tag = 'output window, operand 0, single buffered']
    %10 = vsyncpa [#allocation4], 0
    %11 = vsyncpa [#allocation7], 0
    %12 = vsyncpa [#allocation10], 0
    %s13 = scalar_lea.sflag [#allocation10], 1
    %14 = vsyncpa %s13, 0
    %15 = vsyncpa [#allocation5], 0
    loop: start=0, step=1, limit=4
    $region2: #{tpu_custom_call.1} parent=1 // loop_pre_header
      _
    $region3: #{tpu_custom_call.1} parent=1 // loop_header
      %s17 = sphi 0, %s21
      %p18 = scmp.ge.s32.totalorder %s17, 4
      %s25 = sphi 0, %s25
      %s27 = sphi 0, %s25
      %s28 = sphi 0, %s27
      %s42 = sphi 0, %s28
      %s46 = sphi 0, %s46
      %s48 = sphi 0, %s46
      %s49 = sphi 0, %s48
      %s63 = sphi 0, %s49
      %s67 = sphi 0, %s67
      %s69 = sphi 0, %s67
      %s70 = sphi 0, %s69
      %s84 = sphi 0, %s70
      %s88 = sphi 0, %s88
      %s90 = sphi 0, %s88
      %s91 = sphi 0, %s90
      %s105 = sphi 0, %s91
      %s111 = sphi 0, %s113
      %s114 = sphi 0, %s111
      %s115 = sphi 0, %s114
      %s131 = sphi 0, %s115
      %s135 = sphi 0, %s135
      %s137 = sphi 0, %s135
      %s138 = sphi 0, %s137
      %s152 = sphi 0, %s138
    $region4: #{tpu_custom_call.1} parent=1 // loop_header_branch
      %20 = sbr.rel (%p18) target = $region8
    $region5: #{tpu_custom_call.1} parent=1 // loop_body
      %s22 = ssub.s32 %s17, 1
      %s23 = ssub.s32 %s17, 2
      %s24 = sadd.s32 %s17, 1
      %s26 = sadd.s32 %s25, 1
      %p29 = scmp.eq.s32.totalorder %s17, 1
      %p30 = scmp.ne.s32.totalorder %s25, %s27
      %p31 = scmp.eq.s32.totalorder %s17, 0
      %p32 = por %p30, %p31
      %p33 = scmp.ne.s32.totalorder %s25, %s27
      %p34 = scmp.eq.s32.totalorder %s22, 1
      %p35 = por %p33, %p34
      %p36 = scmp.ne.s32.totalorder %s27, %s28
      %p37 = scmp.eq.s32.totalorder %s22, 0
      %p38 = por %p36, %p37
      %p39 = scmp.ne.s32.totalorder %s27, %s28
      %p40 = scmp.eq.s32.totalorder %s23, 1
      %p41 = por %p39, %p40
      %p43 = scmp.ne.s32.totalorder %s28, %s42
      %p44 = scmp.eq.s32.totalorder %s23, 0
      %p45 = por %p43, %p44
      %s47 = sadd.s32 %s46, 1
      %p50 = scmp.eq.s32.totalorder %s17, 1
      %p51 = scmp.ne.s32.totalorder %s46, %s48
      %p52 = scmp.eq.s32.totalorder %s17, 0
      %p53 = por %p51, %p52
      %p54 = scmp.ne.s32.totalorder %s46, %s48
      %p55 = scmp.eq.s32.totalorder %s22, 1
      %p56 = por %p54, %p55
      %p57 = scmp.ne.s32.totalorder %s48, %s49
      %p58 = scmp.eq.s32.totalorder %s22, 0
      %p59 = por %p57, %p58
      %p60 = scmp.ne.s32.totalorder %s48, %s49
      %p61 = scmp.eq.s32.totalorder %s23, 1
      %p62 = por %p60, %p61
      %p64 = scmp.ne.s32.totalorder %s49, %s63
      %p65 = scmp.eq.s32.totalorder %s23, 0
      %p66 = por %p64, %p65
      %s68 = sadd.s32 %s67, 1
      %p71 = scmp.eq.s32.totalorder %s17, 1
      %p72 = scmp.ne.s32.totalorder %s67, %s69
      %p73 = scmp.eq.s32.totalorder %s17, 0
      %p74 = por %p72, %p73
      %p75 = scmp.ne.s32.totalorder %s67, %s69
      %p76 = scmp.eq.s32.totalorder %s22, 1
      %p77 = por %p75, %p76
      %p78 = scmp.ne.s32.totalorder %s69, %s70
      %p79 = scmp.eq.s32.totalorder %s22, 0
      %p80 = por %p78, %p79
      %p81 = scmp.ne.s32.totalorder %s69, %s70
      %p82 = scmp.eq.s32.totalorder %s23, 1
      %p83 = por %p81, %p82
      %p85 = scmp.ne.s32.totalorder %s70, %s84
      %p86 = scmp.eq.s32.totalorder %s23, 0
      %p87 = por %p85, %p86
      %s89 = sadd.s32 %s88, 1
      %p92 = scmp.eq.s32.totalorder %s17, 1
      %p93 = scmp.ne.s32.totalorder %s88, %s90
      %p94 = scmp.eq.s32.totalorder %s17, 0
      %p95 = por %p93, %p94
      %p96 = scmp.ne.s32.totalorder %s88, %s90
      %p97 = scmp.eq.s32.totalorder %s22, 1
      %p98 = por %p96, %p97
      %p99 = scmp.ne.s32.totalorder %s90, %s91
      %p100 = scmp.eq.s32.totalorder %s22, 0
      %p101 = por %p99, %p100
      %p102 = scmp.ne.s32.totalorder %s90, %s91
      %p103 = scmp.eq.s32.totalorder %s23, 1
      %p104 = por %p102, %p103
      %p106 = scmp.ne.s32.totalorder %s91, %s105
      %p107 = scmp.eq.s32.totalorder %s23, 0
      %p108 = por %p106, %p107
      %s109 = ssub.s32 %s17, %s24
      %p110 = scmp.eq.s32.totalorder %s109, 0
      %s112 = sadd.s32 %s111, 1
      %s113 = scalar_select %p110, %s111, %s112
      %p116 = pneg %p110
      %p117 = scmp.eq.s32.totalorder %s17, 1
      %p118 = por %p116, %p117
      %p119 = scmp.ne.s32.totalorder %s111, %s114
      %p120 = scmp.eq.s32.totalorder %s17, 0
      %p121 = por %p119, %p120
      %p122 = scmp.ne.s32.totalorder %s111, %s114
      %p123 = scmp.eq.s32.totalorder %s22, 1
      %p124 = por %p122, %p123
      %p125 = scmp.ne.s32.totalorder %s114, %s115
      %p126 = scmp.eq.s32.totalorder %s22, 0
      %p127 = por %p125, %p126
      %p128 = scmp.ne.s32.totalorder %s114, %s115
      %p129 = scmp.eq.s32.totalorder %s23, 1
      %p130 = por %p128, %p129
      %p132 = scmp.ne.s32.totalorder %s115, %s131
      %p133 = scmp.eq.s32.totalorder %s23, 0
      %p134 = por %p132, %p133
      %s136 = sadd.s32 %s135, 1
      %p139 = scmp.eq.s32.totalorder %s17, 1
      %p140 = scmp.ne.s32.totalorder %s135, %s137
      %p141 = scmp.eq.s32.totalorder %s17, 0
      %p142 = por %p140, %p141
      %p143 = scmp.ne.s32.totalorder %s135, %s137
      %p144 = scmp.eq.s32.totalorder %s22, 1
      %p145 = por %p143, %p144
      %p146 = scmp.ne.s32.totalorder %s137, %s138
      %p147 = scmp.eq.s32.totalorder %s22, 0
      %p148 = por %p146, %p147
      %p149 = scmp.ne.s32.totalorder %s137, %s138
      %p150 = scmp.eq.s32.totalorder %s23, 1
      %p151 = por %p149, %p150
      %p153 = scmp.ne.s32.totalorder %s138, %s152
      %p154 = scmp.eq.s32.totalorder %s23, 0
      %p155 = por %p153, %p154
      %p156 = scmp.le.s32.totalorder 1, %s17
      %p157 = scmp.lt.s32.totalorder %s17, 3
      %p158 = pnand %p156, %p157
      %p159 = pneg %p158
      // Predicated region
      $region9: #{tpu_custom_call.1} parent=5 // pred_check
        _
      $region10: #{tpu_custom_call.1} parent=5 // pred_check_branch
        %161 = sbr.rel (%p158) target = $region12
      $region11: #{tpu_custom_call.1} parent=5 // pred_region
        %s162 = ssub.s32 %s17, 1
        // Predicated region
        $region13: #{tpu_custom_call.1} parent=11 // pred_check
          %p163 = pneg %p38
        $region14: #{tpu_custom_call.1} parent=11 // pred_check_branch
          %165 = sbr.rel (%p163) target = $region16
        $region15: #{tpu_custom_call.1} parent=11 // pred_region
          %s167 = ssub.s32 256, 256
          %168 = vsyncadd [#allocation4], %s167
          %s169 = sshll.u32 [#allocation3], 4
          %s170 = int_to_ptr.vmem [resolvable:$true] %s169
          %175 = dma.hbm_to_vmem [thread:$0]  %s0, 256, %s170, [#allocation4], 128, 128, 8
        $region16: #{tpu_custom_call.1} parent=11 // pred_fallthru
          _
        // Predicated region
        $region17: #{tpu_custom_call.1} parent=11 // pred_check
          %p176 = pneg %p59
        $region18: #{tpu_custom_call.1} parent=11 // pred_check_branch
          %178 = sbr.rel (%p176) target = $region20
        $region19: #{tpu_custom_call.1} parent=11 // pred_region
          %s180 = ssub.s32 128, 128
          %181 = vsyncadd [#allocation7], %s180
          %s183 = sshll.u32 [#allocation6], 4
          %s184 = int_to_ptr.vmem [resolvable:$true] %s183
          %186 = dma.hbm_to_vmem [thread:$0]  %s1, 128, %s184, [#allocation7]
        $region20: #{tpu_custom_call.1} parent=11 // pred_fallthru
          _
        // Predicated region
        $region21: #{tpu_custom_call.1} parent=11 // pred_check
          %p187 = pneg %p80
        $region22: #{tpu_custom_call.1} parent=11 // pred_check_branch
          %189 = sbr.rel (%p187) target = $region24
        $region23: #{tpu_custom_call.1} parent=11 // pred_region
          %s191 = ssub.s32 128, 128
          %192 = vsyncadd [#allocation7], %s191
          %s194 = sshll.u32 [#allocation8], 4
          %s195 = int_to_ptr.vmem [resolvable:$true] %s194
          %197 = dma.hbm_to_vmem [thread:$0]  %s2, 128, %s195, [#allocation7]
        $region24: #{tpu_custom_call.1} parent=11 // pred_fallthru
          _
        // Predicated region
        $region25: #{tpu_custom_call.1} parent=11 // pred_check
          %p198 = pneg %p101
        $region26: #{tpu_custom_call.1} parent=11 // pred_check_branch
          %200 = sbr.rel (%p198) target = $region28
        $region27: #{tpu_custom_call.1} parent=11 // pred_region
          _
        $region28: #{tpu_custom_call.1} parent=11 // pred_fallthru
          _
      $region12: #{tpu_custom_call.1} parent=5 // pred_fallthru
        _
      %p201 = scmp.lt.s32.totalorder %s17, 2
      // Predicated region
      $region29: #{tpu_custom_call.1} parent=5 // pred_check
        %p202 = pneg %p201
      $region30: #{tpu_custom_call.1} parent=5 // pred_check_branch
        %204 = sbr.rel (%p202) target = $region32
      $region31: #{tpu_custom_call.1} parent=5 // pred_region
        // Predicated region
        $region33: #{tpu_custom_call.1} parent=31 // pred_check
          %p205 = pneg %p121
        $region34: #{tpu_custom_call.1} parent=31 // pred_check_branch
          %207 = sbr.rel (%p205) target = $region36
        $region35: #{tpu_custom_call.1} parent=31 // pred_region
          %s208 = sand.u32 %s111, 1
          %s209 = scalar_lea.sflag [#allocation10], %s208
          %s210 = sand.u32 %s111, 1
          %s211 = smul.addr %s210, 128
          %s212 = scalar_lea.vmem [#allocation9], %s211
          %s213 = smul.u32 4, %s17
          %s215 = ssub.s32 2048, 2048
          %216 = vsyncadd %s209, %s215
          %s217 = smul.addr %s213, 4
          %s218 = smul.addr %s217, 128
          %s219 = scalar_lea.hbm %s4, %s218
          %s220 = sshll.u32 %s212, 4
          %s221 = int_to_ptr.vmem [resolvable:$true] %s220
          %226 = dma.hbm_to_vmem [thread:$0]  %s219, 2048, %s221, %s209, 128, 128, 8
        $region36: #{tpu_custom_call.1} parent=31 // pred_fallthru
          _
      $region32: #{tpu_custom_call.1} parent=5 // pred_fallthru
        _
      %p227 = scmp.le.s32.totalorder 1, %s17
      %p228 = scmp.lt.s32.totalorder %s17, 3
      %p229 = pnand %p227, %p228
      %p230 = pneg %p229
      // Predicated region
      $region37: #{tpu_custom_call.1} parent=5 // pred_check
        _
      $region38: #{tpu_custom_call.1} parent=5 // pred_check_branch
        %232 = sbr.rel (%p229) target = $region40
      $region39: #{tpu_custom_call.1} parent=5 // pred_region
        %s233 = ssub.s32 %s17, 1
        // Predicated region
        $region41: #{tpu_custom_call.1} parent=39 // pred_check
          %p234 = pneg %p38
        $region42: #{tpu_custom_call.1} parent=39 // pred_check_branch
          %236 = sbr.rel (%p234) target = $region44
        $region43: #{tpu_custom_call.1} parent=39 // pred_region
          %237 = dma.done [#allocation4], 256
        $region44: #{tpu_custom_call.1} parent=39 // pred_fallthru
          _
        // Predicated region
        $region45: #{tpu_custom_call.1} parent=39 // pred_check
          %p238 = pneg %p59
        $region46: #{tpu_custom_call.1} parent=39 // pred_check_branch
          %240 = sbr.rel (%p238) target = $region48
        $region47: #{tpu_custom_call.1} parent=39 // pred_region
          %241 = dma.done [#allocation7], 128
        $region48: #{tpu_custom_call.1} parent=39 // pred_fallthru
          _
        // Predicated region
        $region49: #{tpu_custom_call.1} parent=39 // pred_check
          %p242 = pneg %p80
        $region50: #{tpu_custom_call.1} parent=39 // pred_check_branch
          %244 = sbr.rel (%p242) target = $region52
        $region51: #{tpu_custom_call.1} parent=39 // pred_region
          %245 = dma.done [#allocation7], 128
        $region52: #{tpu_custom_call.1} parent=39 // pred_fallthru
          _
        %s246 = sand.u32 %s114, 1
        %s247 = scalar_lea.sflag [#allocation10], %s246
        %s248 = sand.u32 %s114, 1
        %s249 = smul.addr %s248, 128
        %s250 = scalar_lea.vmem [#allocation9], %s249
        // Predicated region
        $region53: #{tpu_custom_call.1} parent=39 // pred_check
          %p251 = pneg %p127
        $region54: #{tpu_custom_call.1} parent=39 // pred_check_branch
          %253 = sbr.rel (%p251) target = $region56
        $region55: #{tpu_custom_call.1} parent=39 // pred_region
          %254 = dma.done %s247, 2048
        $region56: #{tpu_custom_call.1} parent=39 // pred_fallthru
          _
        %p255 = pneg %p38
        %p256 = pneg %p35
        %p257 = pneg %p59
        %p258 = pneg %p56
        %p259 = pneg %p80
        %p260 = pneg %p77
        %p261 = pneg %p101
        %p262 = pneg %p98
        %s263 = sand.u32 %s114, 1
        %s264 = scalar_lea.sflag [#allocation10], %s263
        %s265 = sand.u32 %s114, 1
        %s266 = smul.addr %s265, 128
        %s267 = scalar_lea.vmem [#allocation9], %s266
        %p268 = pneg %p127
        %p269 = pneg %p124
        %p270 = pneg %p148
        %p271 = pneg %p145
        %s272 = smul.u32 4, %s22
        %s273 = smul.u32 %s22, 4
        %s274 = scalar_lea.vmem [#allocation3], %s273
        %v275 = vld [vmem:[%s274] sm:$0xf]
        %v276 = vld [vmem:[%s250] sm:$0xff]
        %v277 = vld [vmem:[%s250 + $0x8] sm:$0xff]
        %v278 = vld [vmem:[%s250 + $0x10] sm:$0xff]
        %v279 = vld [vmem:[%s250 + $0x18] sm:$0xff]
        %v280 = vld [vmem:[%s250 + $0x20] sm:$0xff]
        %v281 = vld [vmem:[%s250 + $0x28] sm:$0xff]
        %v282 = vld [vmem:[%s250 + $0x30] sm:$0xff]
        %v283 = vld [vmem:[%s250 + $0x38] sm:$0xff]
        %v284 = vld [vmem:[%s250 + $0x40] sm:$0xff]
        %v285 = vld [vmem:[%s250 + $0x48] sm:$0xff]
        %v286 = vld [vmem:[%s250 + $0x50] sm:$0xff]
        %v287 = vld [vmem:[%s250 + $0x58] sm:$0xff]
        %v288 = vld [vmem:[%s250 + $0x60] sm:$0xff]
        %v289 = vld [vmem:[%s250 + $0x68] sm:$0xff]
        %v290 = vld [vmem:[%s250 + $0x70] sm:$0xff]
        %v291 = vld [vmem:[%s250 + $0x78] sm:$0xff]
        %v294 = vunpack.c.l.s4 1966171168
        %v295 = vunpack.c.0.s8 %v294
        %v296 = vlaneseq
        %v297 = vshrl.u32 %v296, 7
        %v298 = vsub.s32 %v295, %v297
        %v299 = vrot.slane %v275, %v298
        %v300 = vcombine.high %v299, %v299
        %v302 = vunpack.c.l.s4 1966171168
        %v303 = vunpack.c.0.s8 %v302
        %v304 = vlaneseq
        %v305 = vshrl.u32 %v304, 7
        %v306 = vsub.s32 %v303, %v305
        %v307 = vrot.slane %v299, %v306
        %v309 = vunpack.c.l.s4 1966171168
        %v310 = vunpack.c.0.s8 %v309
        %v311 = vlaneseq
        %v312 = vshrl.u32 %v311, 7
        %v313 = vsub.s32 %v310, %v312
        %v314 = vrot.slane %v300, %v313
        %v315 = vcombine.high %v307, %v307
        %v316 = vcombine.high %v314, %v314
        %v317 = vlaneseq
        %v318 = vshrl.u32 %v317, 7
        %v319 = vsub.s32 0, %v318
        %v320 = vrot.slane %v307, %v319
        %v321 = vlaneseq
        %v322 = vshrl.u32 %v321, 7
        %v323 = vsub.s32 0, %v322
        %v324 = vrot.slane %v314, %v323
        %v325 = vlaneseq
        %v326 = vshrl.u32 %v325, 7
        %v327 = vsub.s32 0, %v326
        %v328 = vrot.slane %v315, %v327
        %v329 = vlaneseq
        %v330 = vshrl.u32 %v329, 7
        %v331 = vsub.s32 0, %v330
        %v332 = vrot.slane %v316, %v331
        %v337 = vmul.f32 %v276, %v320
        %v338 = vmul.f32 %v277, %v320
        %v339 = vmul.f32 %v278, %v320
        %v340 = vmul.f32 %v279, %v320
        %v341 = vmul.f32 %v280, %v324
        %v342 = vmul.f32 %v281, %v324
        %v343 = vmul.f32 %v282, %v324
        %v344 = vmul.f32 %v283, %v324
        %v345 = vmul.f32 %v284, %v328
        %v346 = vmul.f32 %v285, %v328
        %v347 = vmul.f32 %v286, %v328
        %v348 = vmul.f32 %v287, %v328
        %v349 = vmul.f32 %v288, %v332
        %v350 = vmul.f32 %v289, %v332
        %v351 = vmul.f32 %v290, %v332
        %v352 = vmul.f32 %v291, %v332
        %vm353 = vcmask 261120
        %v354 = vsel %vm353, %v337, 0.0
        %355 = vadd.xlane.f32.xlu0 %v354
        %v356 = vpop.xlane.xlu0 %355
        %v357 = vsel %vm353, %v338, 0.0
        %358 = vadd.xlane.f32.xlu0 %v357
        %v359 = vpop.xlane.xlu0 %358
        %v360 = vsel %vm353, %v339, 0.0
        %361 = vadd.xlane.f32.xlu0 %v360
        %v362 = vpop.xlane.xlu0 %361
        %v363 = vsel %vm353, %v340, 0.0
        %364 = vadd.xlane.f32.xlu0 %v363
        %v365 = vpop.xlane.xlu0 %364
        %v366 = vsel %vm353, %v341, 0.0
        %367 = vadd.xlane.f32.xlu0 %v366
        %v368 = vpop.xlane.xlu0 %367
        %v369 = vsel %vm353, %v342, 0.0
        %370 = vadd.xlane.f32.xlu0 %v369
        %v371 = vpop.xlane.xlu0 %370
        %v372 = vsel %vm353, %v343, 0.0
        %373 = vadd.xlane.f32.xlu0 %v372
        %v374 = vpop.xlane.xlu0 %373
        %v375 = vsel %vm353, %v344, 0.0
        %376 = vadd.xlane.f32.xlu0 %v375
        %v377 = vpop.xlane.xlu0 %376
        %v378 = vsel %vm353, %v345, 0.0
        %379 = vadd.xlane.f32.xlu0 %v378
        %v380 = vpop.xlane.xlu0 %379
        %v381 = vsel %vm353, %v346, 0.0
        %382 = vadd.xlane.f32.xlu0 %v381
        %v383 = vpop.xlane.xlu0 %382
        %v384 = vsel %vm353, %v347, 0.0
        %385 = vadd.xlane.f32.xlu0 %v384
        %v386 = vpop.xlane.xlu0 %385
        %v387 = vsel %vm353, %v348, 0.0
        %388 = vadd.xlane.f32.xlu0 %v387
        %v389 = vpop.xlane.xlu0 %388
        %v390 = vsel %vm353, %v349, 0.0
        %391 = vadd.xlane.f32.xlu0 %v390
        %v392 = vpop.xlane.xlu0 %391
        %v393 = vsel %vm353, %v350, 0.0
        %394 = vadd.xlane.f32.xlu0 %v393
        %v395 = vpop.xlane.xlu0 %394
        %v396 = vsel %vm353, %v351, 0.0
        %397 = vadd.xlane.f32.xlu0 %v396
        %v398 = vpop.xlane.xlu0 %397
        %v399 = vsel %vm353, %v352, 0.0
        %400 = vadd.xlane.f32.xlu0 %v399
        %v401 = vpop.xlane.xlu0 %400
        %v418 = vlaneseq
        %v419 = vand.u32 %v418, 127
        %v420 = vlaneseq
        %v421 = vshrl.u32 %v420, 7
        %v422 = vsub.s32 %v419, %v421
        %v423 = vrot.slane %v356, %v422
        %v424 = vadd.s32 %v419, 4294967288
        %v425 = vlaneseq
        %v426 = vshrl.u32 %v425, 7
        %v427 = vsub.s32 %v424, %v426
        %v428 = vrot.slane %v359, %v427
        %vm429 = vcmask 130112
        %v430 = vsel %vm429, %v428, %v423
        %v431 = vadd.s32 %v419, 4294967280
        %v432 = vlaneseq
        %v433 = vshrl.u32 %v432, 7
        %v434 = vsub.s32 %v431, %v433
        %v435 = vrot.slane %v362, %v434
        %vm436 = vcmask 195712
        %v437 = vsel %vm436, %v435, %v430
        %v438 = vadd.s32 %v419, 4294967272
        %v439 = vlaneseq
        %v440 = vshrl.u32 %v439, 7
        %v441 = vsub.s32 %v438, %v440
        %v442 = vrot.slane %v365, %v441
        %vm443 = vcmask 261312
        %v444 = vsel %vm443, %v442, %v437
        %v445 = vlaneseq
        %v446 = vshrl.u32 %v445, 7
        %v447 = vsub.s32 %v419, %v446
        %v448 = vrot.slane %v368, %v447
        %v449 = vlaneseq
        %v450 = vshrl.u32 %v449, 7
        %v451 = vsub.s32 %v424, %v450
        %v452 = vrot.slane %v371, %v451
        %v453 = vsel %vm429, %v452, %v448
        %v454 = vlaneseq
        %v455 = vshrl.u32 %v454, 7
        %v456 = vsub.s32 %v431, %v455
        %v457 = vrot.slane %v374, %v456
        %v458 = vsel %vm436, %v457, %v453
        %v459 = vlaneseq
        %v460 = vshrl.u32 %v459, 7
        %v461 = vsub.s32 %v438, %v460
        %v462 = vrot.slane %v377, %v461
        %v463 = vsel %vm443, %v462, %v458
        %v464 = vlaneseq
        %v465 = vshrl.u32 %v464, 7
        %v466 = vsub.s32 %v419, %v465
        %v467 = vrot.slane %v380, %v466
        %v468 = vlaneseq
        %v469 = vshrl.u32 %v468, 7
        %v470 = vsub.s32 %v424, %v469
        %v471 = vrot.slane %v383, %v470
        %v472 = vsel %vm429, %v471, %v467
        %v473 = vlaneseq
        %v474 = vshrl.u32 %v473, 7
        %v475 = vsub.s32 %v431, %v474
        %v476 = vrot.slane %v386, %v475
        %v477 = vsel %vm436, %v476, %v472
        %v478 = vlaneseq
        %v479 = vshrl.u32 %v478, 7
        %v480 = vsub.s32 %v438, %v479
        %v481 = vrot.slane %v389, %v480
        %v482 = vsel %vm443, %v481, %v477
        %v483 = vlaneseq
        %v484 = vshrl.u32 %v483, 7
        %v485 = vsub.s32 %v419, %v484
        %v486 = vrot.slane %v392, %v485
        %v487 = vlaneseq
        %v488 = vshrl.u32 %v487, 7
        %v489 = vsub.s32 %v424, %v488
        %v490 = vrot.slane %v395, %v489
        %v491 = vsel %vm429, %v490, %v486
        %v492 = vlaneseq
        %v493 = vshrl.u32 %v492, 7
        %v494 = vsub.s32 %v431, %v493
        %v495 = vrot.slane %v398, %v494
        %v496 = vsel %vm436, %v495, %v491
        %v497 = vlaneseq
        %v498 = vshrl.u32 %v497, 7
        %v499 = vsub.s32 %v438, %v498
        %v500 = vrot.slane %v401, %v499
        %v501 = vsel %vm443, %v500, %v496
        %vm502 = vcmask 1041409
        %v503 = vsel %vm502, %v463, %v444
        %vm504 = vcmask 1042434
        %v505 = vsel %vm504, %v482, %v503
        %vm506 = vcmask 1043459
        %v507 = vsel %vm506, %v501, %v505
        %v509 = vmul.f32 %v275, %v507
        %vm510 = vcmask 257024
        %v511 = vsel %vm510, %v509, 0.0
        %512 = vadd.xlane.f32.xlu0 %v511
        %v513 = vpop.xlane.xlu0 %512
        %v514 = vmul.f32 %v513, 0.2
        %s515 = scalar_lea.vmem [#allocation2], %s273
        %vm516 = vcmask 3072
        %517 = vst.msk [vmem:[%s515] sm:$0xf] %vm516, %v514
        %p518 = scmp.eq.s32.totalorder %s22, 1
        // Predicated region
        $region57: #{tpu_custom_call.1} parent=39 // pred_check
          %p519 = pneg %p518
        $region58: #{tpu_custom_call.1} parent=39 // pred_check_branch
          %521 = sbr.rel (%p519) target = $region60
        $region59: #{tpu_custom_call.1} parent=39 // pred_region
          %v522 = vld [vmem:[#allocation3] sm:$0xff]
          %v523 = vld [vmem:[#allocation3 + $0x8] sm:$0xff]
          %v525 = vsel %vm353, %v522, 0
          %v528 = vsel %vm353, %v523, 0
          %530 = vmatprep.subr.mxu0 0.0
          %531 = vmatpush1.xpose.msra.mxu0 %v525
          %532 = vmatprep.subr.mxu0 0.0
          %533 = vmatpush1.xpose.msra.mxu0 %v528
          %534 = vmatprep.subr.mxu0 0.0
          %535 = vmatpush1.xpose.msra.mxu0 0.0
          %536 = vmatprep.subr.mxu0 0.0
          %537 = vmatpush1.xpose.msra.mxu0 0.0
          %538 = vmatprep.subr.mxu0 0.0
          %539 = vmatpush1.xpose.msra.mxu0 0.0
          %540 = vmatprep.subr.mxu0 0.0
          %541 = vmatpush1.xpose.msra.mxu0 0.0
          %542 = vmatprep.subr.mxu0 0.0
          %543 = vmatpush1.xpose.msra.mxu0 0.0
          %544 = vmatprep.subr.mxu0 0.0
          %545 = vmatpush1.xpose.msra.mxu0 0.0
          %546 = vmatprep.subr.mxu0 0.0
          %547 = vmatpush1.xpose.msra.mxu0 0.0
          %548 = vmatprep.subr.mxu0 0.0
          %549 = vmatpush1.xpose.msra.mxu0 0.0
          %550 = vmatprep.subr.mxu0 0.0
          %551 = vmatpush1.xpose.msra.mxu0 0.0
          %552 = vmatprep.subr.mxu0 0.0
          %553 = vmatpush1.xpose.msra.mxu0 0.0
          %554 = vmatprep.subr.mxu0 0.0
          %555 = vmatpush1.xpose.msra.mxu0 0.0
          %556 = vmatprep.subr.mxu0 0.0
          %557 = vmatpush1.xpose.msra.mxu0 0.0
          %558 = vmatprep.subr.mxu0 0.0
          %559 = vmatpush1.xpose.msra.mxu0 0.0
          %560 = vmatprep.subr.mxu0 0.0
          %561 = vmatpush1.xpose.msra.mxu0 0.0
          %562 = vmatprep.subr.mxu0 0.0
          %563 = vmatpush1.xpose.msra.mxu0 0.0
          %564 = vmatprep.subr.mxu0 0.0
          %565 = vmatpush1.xpose.msra.mxu0 0.0
          %566 = vmatprep.subr.mxu0 0.0
          %567 = vmatpush1.xpose.msra.mxu0 0.0
          %568 = vmatprep.subr.mxu0 0.0
          %569 = vmatpush1.xpose.msra.mxu0 0.0
          %570 = vmatprep.subr.mxu0 0.0
          %571 = vmatpush1.xpose.msra.mxu0 0.0
          %572 = vmatprep.subr.mxu0 0.0
          %573 = vmatpush1.xpose.msra.mxu0 0.0
          %574 = vmatprep.subr.mxu0 0.0
          %575 = vmatpush1.xpose.msra.mxu0 0.0
          %576 = vmatprep.subr.mxu0 0.0
          %577 = vmatpush1.xpose.msra.mxu0 0.0
          %578 = vmatprep.subr.mxu0 0.0
          %579 = vmatpush1.xpose.msra.mxu0 0.0
          %580 = vmatprep.subr.mxu0 0.0
          %581 = vmatpush1.xpose.msra.mxu0 0.0
          %582 = vmatprep.subr.mxu0 0.0
          %583 = vmatpush1.xpose.msra.mxu0 0.0
          %584 = vmatprep.subr.mxu0 0.0
          %585 = vmatpush1.xpose.msra.mxu0 0.0
          %586 = vmatprep.subr.mxu0 0.0
          %587 = vmatpush1.xpose.msra.mxu0 0.0
          %588 = vmatprep.subr.mxu0 0.0
          %589 = vmatpush1.xpose.msra.mxu0 0.0
          %590 = vmatprep.subr.mxu0 0.0
          %591 = vmatpush1.xpose.msra.mxu0 0.0
          %592 = vmatprep.subr.mxu0 0.0
          %593 = vmatpush1.xpose.msra.mxu0 0.0
          %594 = vmatprep.mubr.f32.mxu0 0.0
          %595 = vmatmul.mubr.f32.gmra.mrb[0].mxu0 %v525
          %v596 = vpop.f32.mrb[0].mxu0
          %v597 = vadd.f32 0.0, %v596
          %v598 = vpop.f32.mrb[0].mxu0
          %599 = vmatprep.mubr.f32.mxu0 0.0
          %600 = vmatmul.mubr.f32.gmra.mrb[0].mxu0 %v528
          %v601 = vpop.f32.mrb[0].mxu0
          %v602 = vadd.f32 0.0, %v601
          %v603 = vpop.f32.mrb[0].mxu0
          %604 = vdwg.mxu0
          %v605 = vmul.f32 %v597, 2.0
          %v606 = vmul.f32 %v602, 2.0
          %v607 = vmul.f32 %v522, %v523
          %v608 = vsel %vm353, %v607, 0.0
          %609 = vadd.xlane.f32.xlu0 %v608
          %v610 = vpop.xlane.xlu0 %609
          %v611 = vmul.f32 %v610, 2.0
          %v612 = vld [vmem:[#allocation2] sm:$0xff]
          %v613 = vadd.f32 %v611, %v612
          %v614 = vmul.f32 %v613, 1.442695
          %v615 = vpow.pop %v614
          %v616 = vlaneseq
          %v617 = vshrl.u32 %v616, 7
          %v618 = vadd.s32 %v617, 8
          %vm619 = vcmp.lt.s32.totalorder %v617, 8
          %vm620 = vcmp.lt.s32.totalorder %v618, 8
          %v621 = vadd.s32 %v618, 8
          %v622 = vsub.s32 %v617, 8
          %v623 = vsel %vm619, %v618, %v622
          %v624 = vsel %vm620, %v621, %v617
          %vm625 = vcmp.ne.s32.totalorder %v419, %v617
          %vm626 = vcmp.ne.s32.totalorder %v419, %v618
          %vm627 = vcmp.ne.s32.totalorder %v419, %v623
          %vm628 = vcmp.ne.s32.totalorder %v419, %v624
          %vm629 = vmand %vm625, %vm627
          %vm630 = vmand %vm626, %vm628
          %v631 = vsel %vm629, %v605, -1e+30
          %v632 = vsel %vm630, %v606, -1e+30
          %v633 = vmul.f32 %v631, 1.442695
          %v634 = vpow.pop %v633
          %v635 = vmul.f32 %v632, 1.442695
          %v636 = vpow.pop %v635
          %vm637 = vcmask 130048
          %v638 = vsel %vm637, %v634, 0.0
          %639 = vadd.xlane.f32.xlu0 %v638
          %v640 = vpop.xlane.xlu0 %639
          %v641 = vsel %vm637, %v636, 0.0
          %642 = vadd.xlane.f32.xlu0 %v641
          %v643 = vpop.xlane.xlu0 %642
          %v644 = vld [vmem:[%s3] sm:$0x1]
          %v645 = vld [vmem:[#allocation6] sm:$0xff]
          %vm646 = vcmask 48128
          %v647 = vsel %vm646, %v645, -inf
          %648 = vmax.xlane.f32.xlu0 %v647
          %v649 = vpop.xlane.xlu0 %648
          %vm650 = vcmp.ge.f32.partialorder %v645, %v649
          %v651 = vsel %vm650, %v419, 6
          %v652 = vsel %vm646, %v651, 2147483647
          %v653 = vand.u32 %v652, 65535
          %v654 = vshra.s32 %v652, 16
          %v655 = vcvt.s32.f32 %v653
          %v656 = vcvt.s32.f32 %v654
          %657 = vmin.xlane.f32.xlu0 %v656
          %v658 = vpop.xlane.xlu0 %657
          %vm659 = vcmp.eq.f32.partialorder %v656, %v658
          %v660 = vsel %vm659, %v655, inf
          %661 = vmin.xlane.f32.xlu0 %v660
          %v662 = vpop.xlane.xlu0 %661
          %v663 = vcvt.f32.s32 %v662
          %v664 = vcvt.f32.s32 %v658
          %v665 = vshll.u32 %v664, 16
          %v666 = vadd.s32 %v665, %v663
          %vm667 = vcmp.eq.s32.totalorder %v419, %v666
          %v668 = vsel %vm667, 1, 0
          %v669 = vcvt.s32.f32 %v668
          %v671 = vlaneseq
          %v672 = vshrl.u32 %v671, 7
          %v673 = vsub.s32 0, %v672
          %v674 = vrot.slane %v644, %v673
          %v676 = vmul.f32 %v669, %v674
          %v677 = vsel %vm646, %v676, 0.0
          %678 = vadd.xlane.f32.xlu0 %v677
          %v679 = vpop.xlane.xlu0 %678
          %v680 = vsub.f32 0.0, %v679
          %v681 = vmul.f32 %v680, 14.0
          %v682 = vmul.f32 %v681, %v615
          %v683 = vadd.f32 %v682, %v640
          %v684 = vsub.f32 1.0, %v679
          %v685 = vrcp.pop %v684
          %v686 = vmul.f32 %v683, %v685
          %v687 = vmax.f32 %v686, 1.894694
          %v688 = vadd.f32 %v615, %v687
          %v689 = vlog2.pop %v688
          %v690 = vmul.f32 %v689, 0.6931472
          %v691 = vsub.f32 %v690, %v611
          %vm692 = vcmask 7168
          %v693 = vsel %vm692, %v691, 0.0
          %v694 = vrot.slane %v693, 4
          %v695 = vadd.f32 %v693, %v694
          %v696 = vrot.slane %v695, 2
          %v697 = vadd.f32 %v695, %v696
          %v698 = vrot.slane %v697, 1
          %v699 = vadd.f32 %v697, %v698
          %v700 = vld [vmem:[#allocation8] sm:$0xff]
          %v701 = vsel %vm646, %v700, -inf
          %702 = vmax.xlane.f32.xlu0 %v701
          %v703 = vpop.xlane.xlu0 %702
          %vm704 = vcmp.ge.f32.partialorder %v700, %v703
          %v705 = vsel %vm704, %v419, 6
          %v706 = vsel %vm646, %v705, 2147483647
          %v707 = vand.u32 %v706, 65535
          %v708 = vshra.s32 %v706, 16
          %v709 = vcvt.s32.f32 %v707
          %v710 = vcvt.s32.f32 %v708
          %711 = vmin.xlane.f32.xlu0 %v710
          %v712 = vpop.xlane.xlu0 %711
          %vm713 = vcmp.eq.f32.partialorder %v710, %v712
          %v714 = vsel %vm713, %v709, inf
          %715 = vmin.xlane.f32.xlu0 %v714
          %v716 = vpop.xlane.xlu0 %715
          %v717 = vcvt.f32.s32 %v716
          %v718 = vcvt.f32.s32 %v712
          %v719 = vshll.u32 %v718, 16
          %v720 = vadd.s32 %v719, %v717
          %vm721 = vcmp.eq.s32.totalorder %v419, %v720
          %v722 = vsel %vm721, 1, 0
          %v723 = vcvt.s32.f32 %v722
          %v724 = vmul.f32 %v723, %v674
          %v725 = vsel %vm646, %v724, 0.0
          %726 = vadd.xlane.f32.xlu0 %v725
          %v727 = vpop.xlane.xlu0 %726
          %v728 = vsub.f32 0.0, %v727
          %v729 = vmul.f32 %v728, 14.0
          %v730 = vmul.f32 %v729, %v615
          %v731 = vadd.f32 %v730, %v643
          %v732 = vsub.f32 1.0, %v727
          %v733 = vrcp.pop %v732
          %v734 = vmul.f32 %v731, %v733
          %v735 = vmax.f32 %v734, 1.894694
          %v736 = vadd.f32 %v615, %v735
          %v737 = vlog2.pop %v736
          %v738 = vmul.f32 %v737, 0.6931472
          %v739 = vsub.f32 %v738, %v611
          %v740 = vsel %vm692, %v739, 0.0
          %v741 = vrot.slane %v740, 4
          %v742 = vadd.f32 %v740, %v741
          %v743 = vrot.slane %v742, 2
          %v744 = vadd.f32 %v742, %v743
          %v745 = vrot.slane %v744, 1
          %v746 = vadd.f32 %v744, %v745
          %v747 = vadd.f32 %v699, %v746
          %v748 = vrcp.pop 16.0
          %v749 = vmul.f32 %v747, %v748
          %vm750 = vcmask 0
          %751 = vst.msk [vmem:[#allocation11] sm:$0x1] %vm750, %v749
        $region60: #{tpu_custom_call.1} parent=39 // pred_fallthru
          _
        // Predicated region
        $region61: #{tpu_custom_call.1} parent=39 // pred_check
          %p752 = pneg %p145
        $region62: #{tpu_custom_call.1} parent=39 // pred_check_branch
          %754 = sbr.rel (%p752) target = $region64
        $region63: #{tpu_custom_call.1} parent=39 // pred_region
          %s756 = ssub.s32 16, 16
          %757 = vsyncadd [#allocation5], %s756
          %s759 = sshll.u32 [#allocation11], 4
          %s760 = int_to_ptr.vmem [resolvable:$true] %s759
          %762 = dma.vmem_to_hbm [thread:$0]  %s760, 16, %s5, [#allocation5]
        $region64: #{tpu_custom_call.1} parent=39 // pred_fallthru
          _
        // Predicated region
        $region65: #{tpu_custom_call.1} parent=39 // pred_check
          %p763 = pneg %p145
        $region66: #{tpu_custom_call.1} parent=39 // pred_check_branch
          %765 = sbr.rel (%p763) target = $region68
        $region67: #{tpu_custom_call.1} parent=39 // pred_region
          %766 = dma.done [#allocation5], 16
        $region68: #{tpu_custom_call.1} parent=39 // pred_fallthru
          _
      $region40: #{tpu_custom_call.1} parent=5 // pred_fallthru
        _
      %p767 = scmp.le.s32.totalorder 2, %s17
      // Predicated region
      $region69: #{tpu_custom_call.1} parent=5 // pred_check
        %p768 = pneg %p767
      $region70: #{tpu_custom_call.1} parent=5 // pred_check_branch
        %770 = sbr.rel (%p768) target = $region72
      $region71: #{tpu_custom_call.1} parent=5 // pred_region
        %s771 = ssub.s32 %s17, 2
      $region72: #{tpu_custom_call.1} parent=5 // pred_fallthru
        _
    $region6: #{tpu_custom_call.1} parent=1 // loop_footer
      %s21 = sadd.s32 1, %s17
    $region7: #{tpu_custom_call.1} parent=1 // loop_footer_branch
      %16 = sbr.rel target = $region3
    $region8: #{tpu_custom_call.1} parent=1 // loop_exit
      _
    %772 = vsyncpa [#allocation4], 1
    %s773 = scalar_lea.sflag [#allocation4], 1
    %774 = vsyncpa %s773, 1
    %775 = vsyncpa [#allocation7], 1
    %776 = vsyncpa [#allocation10], 1
    %s777 = scalar_lea.sflag [#allocation10], 1
    %778 = vsyncpa %s777, 1
    %779 = vsyncpa [#allocation5], 1
    %s780 = scalar_lea.sflag [#allocation5], 1
    %781 = vsyncpa %s780, 1

</llo_original>
